<compile_context>
chip_gen: v7x
topology: tpu7x:2x2x1
jax: 0.10.0
libtpu: 0.0.40
codegen_flags: <defaults>
</compile_context>

<pallas_src>
import functools

import jax
import jax.numpy as jnp
from jax.experimental import pallas as pl
from jax.experimental.pallas import tpu as pltpu


# --------------------------------------------------------------------------------------
# Kernels
# --------------------------------------------------------------------------------------
def _scse_fused_kernel(x_ref, w1_ref, w2_ref, ws_ref, bs_ref, o_ref, *, inv_hw):
    """Single-pass kernel: block = (TB, C, HWp) whole images."""
    x = x_ref[...]                                            # (TB, C, HWp)

    # ---- channel SE (cSE): gate from the true spatial mean (padded lanes are zero) ----
    y = jnp.sum(x, axis=2) * inv_hw                           # (TB, C)
    # h = relu(y @ w1.T) and s = h @ w2.T as broadcast-multiply + reduce (tiny; off MXU)
    h = jnp.maximum(
        jnp.sum(y[:, None, :] * w1_ref[...][None, :, :], axis=2), 0.0)   # (TB, Cr)
    s = jnp.sum(h[:, None, :] * w2_ref[...][None, :, :], axis=2)         # (TB, C)
    cse = jax.nn.sigmoid(s)[:, :, None]                       # (TB, C, 1) channel gate

    # ---- spatial SE (sSE): 1x1 conv C -> 1 = per-channel scale + sublane reduce ----
    z = jnp.sum(x * ws_ref[...][None, :, :], axis=1, keepdims=True)      # (TB, 1, HWp)
    sse = jax.nn.sigmoid(z + bs_ref[0])                       # (TB, 1, HWp) spatial gate

    # out = x * cse + x * sse, fused into the store expression (no VMEM temp pass)
    o_ref[...] = (x * (cse + sse)).astype(o_ref.dtype)


def _channel_sum_kernel(x_ref, sum_ref, acc_ref):
    """Two-pass path, pass 1: accumulate per-channel spatial sums over HW tiles."""
    j = pl.program_id(1)

    @pl.when(j == 0)
    def _init():
        acc_ref[...] = jnp.zeros_like(acc_ref)

    acc_ref[...] += jnp.sum(
        x_ref[...].astype(jnp.float32), axis=2, keepdims=True)           # (1, C, 1)

    @pl.when(j == pl.num_programs(1) - 1)
    def _finalize():
        sum_ref[...] = acc_ref[...]


def _scse_apply_kernel(x_ref, cse_ref, ws_ref, bs_ref, o_ref):
    """Two-pass path, pass 2: apply x * (cse + sse) on one (1, C, thw) tile."""
    x = x_ref[...]                                            # (1, C, thw)
    z = jnp.sum(x * ws_ref[...][None, :, :], axis=1, keepdims=True)      # (1, 1, thw)
    sse = jax.nn.sigmoid(z + bs_ref[0])
    o_ref[...] = (x * (cse_ref[...] + sse)).astype(o_ref.dtype)


# --------------------------------------------------------------------------------------
# Wrappers
# --------------------------------------------------------------------------------------
def _scse_single_pass(x, w1, w2, w_s_col, b_s_1d, hw_true,
                      target_block_bytes, vmem_limit_bytes):
    B, C, HWp = x.shape
    Cr = w1.shape[0]
    itemsize = x.dtype.itemsize
    per_batch_bytes = C * HWp * itemsize

    # Largest divisor of B such that the block stays near target_block_bytes.
    # (No ">=2 grid steps" cap anymore — it only shrank blocks.)
    tb_cap = max(1, target_block_bytes // per_batch_bytes)
    tb = 1
    for d in range(1, min(tb_cap, B) + 1):
        if B % d == 0:
            tb = d
    n_steps = B // tb
    block_bytes = tb * per_batch_bytes

    # Small blocks + many steps: deepen input pipelining beyond the default double buffer.
    x_in_kwargs = {}
    if n_steps >= 3 and block_bytes < 512 * 1024:
        x_in_kwargs["pipeline_mode"] = pl.Buffered(3)

    kernel = functools.partial(_scse_fused_kernel, inv_hw=1.0 / float(hw_true))

    cost = pl.CostEstimate(
        flops=6 * B * C * HWp,
        transcendentals=B * (HWp + C),
        bytes_accessed=2 * B * C * HWp * itemsize,
    )

    return pl.pallas_call(
        kernel,
        out_shape=jax.ShapeDtypeStruct((B, C, HWp), x.dtype),
        grid_spec=pltpu.PrefetchScalarGridSpec(
            num_scalar_prefetch=0,
            grid=(n_steps,),
            in_specs=[
                pl.BlockSpec((tb, C, HWp), lambda b: (b, 0, 0), **x_in_kwargs),  # x
                pl.BlockSpec((Cr, C), lambda b: (0, 0)),                         # w1
                pl.BlockSpec((C, Cr), lambda b: (0, 0)),                         # w2
                pl.BlockSpec((C, 1), lambda b: (0, 0)),                          # conv weight (column)
                pl.BlockSpec(memory_space=pltpu.MemorySpace.SMEM),               # conv bias
            ],
            out_specs=pl.BlockSpec((tb, C, HWp), lambda b: (b, 0, 0)),
        ),
        compiler_params=pltpu.CompilerParams(
            dimension_semantics=("parallel",),
            vmem_limit_bytes=vmem_limit_bytes,
        ),
        cost_estimate=cost,
    )(x, w1, w2, w_s_col, b_s_1d)


def _scse_two_pass(x, w1, w2, w_s_col, b_s_1d, hw_true,
                   target_block_bytes, vmem_limit_bytes):
    """Spatially-tiled fallback for large C*HW (single image would blow VMEM)."""
    B, C, HWp = x.shape
    itemsize = x.dtype.itemsize

    # HW tile: multiple of 128 that divides HWp, as close to target_block_bytes as possible.
    n128 = HWp // 128
    lanes128_target = max(1, target_block_bytes // (C * 128 * itemsize))
    best = 1
    for t in range(1, n128 + 1):
        if n128 % t == 0 and t <= lanes128_target:
            best = t
    thw = best * 128
    n_tiles = HWp // thw

    # ---- pass 1: per-channel spatial sums (accumulator over the HW-tile axis) ----
    sums = pl.pallas_call(
        _channel_sum_kernel,
        out_shape=jax.ShapeDtypeStruct((B, C, 1), jnp.float32),
        grid_spec=pltpu.PrefetchScalarGridSpec(
            num_scalar_prefetch=0,
            grid=(B, n_tiles),
            in_specs=[pl.BlockSpec((1, C, thw), lambda b, j: (b, 0, j))],
            out_specs=pl.BlockSpec((1, C, 1), lambda b, j: (b, 0, 0)),
            scratch_shapes=[pltpu.VMEM((1, C, 1), jnp.float32)],
        ),
        compiler_params=pltpu.CompilerParams(
            dimension_semantics=("parallel", "arbitrary"),
            vmem_limit_bytes=vmem_limit_bytes,
        ),
        cost_estimate=pl.CostEstimate(
            flops=B * C * HWp,
            transcendentals=0,
            bytes_accessed=B * C * HWp * itemsize,
        ),
    )(x)

    # ---- tiny cSE MLP on (B, C): leave to XLA (negligible work) ----
    y = sums[:, :, 0] / float(hw_true)                                   # (B, C) f32
    h = jnp.maximum(y @ w1.astype(jnp.float32).T, 0.0)                   # (B, Cr)
    cse = jax.nn.sigmoid(h @ w2.astype(jnp.float32).T).astype(x.dtype)[:, :, None]  # (B, C, 1)

    # ---- pass 2: apply x * (cse + sse) per HW tile ----
    return pl.pallas_call(
        _scse_apply_kernel,
        out_shape=jax.ShapeDtypeStruct((B, C, HWp), x.dtype),
        grid_spec=pltpu.PrefetchScalarGridSpec(
            num_scalar_prefetch=0,
            grid=(B, n_tiles),
            in_specs=[
                pl.BlockSpec((1, C, thw), lambda b, j: (b, 0, j)),       # x tile
                pl.BlockSpec((1, C, 1), lambda b, j: (b, 0, 0)),         # cse gate
                pl.BlockSpec((C, 1), lambda b, j: (0, 0)),               # conv weight
                pl.BlockSpec(memory_space=pltpu.MemorySpace.SMEM),       # conv bias
            ],
            out_specs=pl.BlockSpec((1, C, thw), lambda b, j: (b, 0, j)),
        ),
        compiler_params=pltpu.CompilerParams(
            dimension_semantics=("parallel", "parallel"),
            vmem_limit_bytes=vmem_limit_bytes,
        ),
        cost_estimate=pl.CostEstimate(
            flops=5 * B * C * HWp,
            transcendentals=B * HWp,
            bytes_accessed=2 * B * C * HWp * itemsize,
        ),
    )(x, cse, w_s_col, b_s_1d)


def scse_layer(x_nchw, w1, w2, w_s, b_s, *,
               target_block_bytes=4 * 1024 * 1024,
               max_single_pass_block_bytes=8 * 1024 * 1024,
               vmem_limit_bytes=64 * 1024 * 1024):
    """x_nchw: (B, C, H, W).
    w1: (C//r, C)  first Linear weight (bias=False)
    w2: (C, C//r)  second Linear weight (bias=False)
    w_s: (1, C)    1x1 conv weight (squeezed from (1, C, 1, 1))
    b_s: (1, 1)    1x1 conv bias
    """
    B, C, H, W = x_nchw.shape
    HW = H * W
    itemsize = x_nchw.dtype.itemsize

    # Lane-dense spatial axis: pad HW up to a multiple of 128 (zero pad).
    HWp = ((HW + 127) // 128) * 128
    x = x_nchw.reshape(B, C, HW)
    if HWp != HW:
        x = jnp.pad(x, ((0, 0), (0, 0), (0, HWp - HW)))

    w_s_col = w_s.reshape(C, 1)        # sublane-oriented column for the 1x1 conv
    b_s_1d = b_s.reshape(1)            # scalar bias -> SMEM

    per_batch_bytes = C * HWp * itemsize
    if per_batch_bytes <= max_single_pass_block_bytes:
        out = _scse_single_pass(x, w1, w2, w_s_col, b_s_1d, HW,
                                target_block_bytes, vmem_limit_bytes)
    else:
        out = _scse_two_pass(x, w1, w2, w_s_col, b_s_1d, HW,
                             target_block_bytes, vmem_limit_bytes)

    if HWp != HW:
        out = out[:, :, :HW]
    return out.reshape(B, C, H, W)


# --------------------------------------------------------------------------------------
# Reference & self-test
# --------------------------------------------------------------------------------------
def _reference(x_nchw, w1, w2, w_s, b_s):
    y = jnp.mean(x_nchw, axis=(2, 3))                          # (B, C)
    h = jnp.maximum(y @ w1.T, 0.0)                             # (B, Cr)
    cse = jax.nn.sigmoid(h @ w2.T)[:, :, None, None]           # (B, C, 1, 1)
    sse = jax.nn.sigmoid(
        jnp.einsum("bchw,oc->bohw", x_nchw, w_s) + b_s[0, 0])  # (B, 1, H, W)
    return x_nchw * cse + x_nchw * sse


if __name__ == "__main__":
    key = jax.random.PRNGKey(0)
    B, C, H, W = 2, 32, 16, 16
    reduction = 16
    Cr = C // reduction  # 2

    k_x, k_w1, k_w2, k_ws, k_bs = jax.random.split(key, 5)
    x = jax.random.normal(k_x, (B, C, H, W), dtype=jnp.float32)
    w1 = jax.random.normal(k_w1, (Cr, C), dtype=jnp.float32) * 0.1   # Linear(C, Cr, bias=False)
    w2 = jax.random.normal(k_w2, (C, Cr), dtype=jnp.float32) * 0.1   # Linear(Cr, C, bias=False)
    w_s = jax.random.normal(k_ws, (1, C), dtype=jnp.float32) * 0.1   # Conv2d(C, 1, 1) weight
    b_s = jax.random.normal(k_bs, (1, 1), dtype=jnp.float32) * 0.1   # Conv2d bias

    # 1) main path: HW already a multiple of 128, single fused pass, big block
    out = scse_layer(x, w1, w2, w_s, b_s)
    jax.block_until_ready(out)
    ref = _reference(x, w1, w2, w_s, b_s)
    assert out.shape == (B, C, H, W)
    assert jnp.allclose(out, ref, atol=1e-5, rtol=1e-5), "mismatch (single-pass)"

    # 2) non-multiple-of-128 spatial size -> padded, lane-dense stores, true-HW mean
    x2 = jax.random.normal(k_x, (B, C, 14, 14), dtype=jnp.float32)
    out2 = scse_layer(x2, w1, w2, w_s, b_s)
    ref2 = _reference(x2, w1, w2, w_s, b_s)
    assert jnp.allclose(out2, ref2, atol=1e-5, rtol=1e-5), "mismatch (padded HW)"

    # 3) force the spatially-tiled two-pass fallback (large-image code path)
    out3 = scse_layer(x, w1, w2, w_s, b_s,
                      target_block_bytes=16 * 1024,
                      max_single_pass_block_bytes=16 * 1024)
    assert jnp.allclose(out3, ref, atol=1e-5, rtol=1e-5), "mismatch (two-pass)"

    # 4) many small blocks -> exercises the deeper pl.Buffered(3) input pipeline
    x4 = jax.random.normal(k_x, (8, C, 16, 16), dtype=jnp.float32)
    out4 = scse_layer(x4, w1, w2, w_s, b_s, target_block_bytes=32 * 1024)
    ref4 = _reference(x4, w1, w2, w_s, b_s)
    assert jnp.allclose(out4, ref4, atol=1e-5, rtol=1e-5), "mismatch (buffered path)"

    print("KERNEL_OK")
</pallas_src>

<mosaic_0001>
module attributes {stable_mosaic.version = 11 : i64} {
  func.func @_scse_fused_kernel(%arg0: i32, %arg1: memref<2x32x256xf32, #tpu.memory_space<vmem>>, %arg2: memref<2x32xf32, #tpu.memory_space<vmem>>, %arg3: memref<32x2xf32, #tpu.memory_space<vmem>>, %arg4: memref<32x1xf32, #tpu.memory_space<vmem>>, %arg5: memref<1xf32, #tpu.memory_space<smem>>, %arg6: memref<2x32x256xf32, #tpu.memory_space<vmem>>) attributes {dimension_semantics = [#tpu.dimension_semantics<parallel>], iteration_bounds = array<i64: 1>, scalar_prefetch = 0 : i64, scratch_operands = 0 : i64, tpu.core_type = #tpu.core_type<tc>, window_params = [{transform_indices = @transform_0, window_bounds = array<i64: 2, 32, 256>}, {pipeline_mode = #tpu.pipeline_mode<synchronous>, transform_indices = @transform_1, window_bounds = array<i64: 2, 32>}, {pipeline_mode = #tpu.pipeline_mode<synchronous>, transform_indices = @transform_2, window_bounds = array<i64: 32, 2>}, {pipeline_mode = #tpu.pipeline_mode<synchronous>, transform_indices = @transform_3, window_bounds = array<i64: 32, 1>}, {transform_indices = @transform_4, window_bounds = array<i64: 1>}, {transform_indices = @transform_5, window_bounds = array<i64: 2, 32, 256>}]} {
    %c0 = arith.constant 0 : index
    %c0_0 = arith.constant 0 : index
    %c0_1 = arith.constant 0 : index
    %0 = vector.load %arg1[%c0, %c0_0, %c0_1] : memref<2x32x256xf32, #tpu.memory_space<vmem>>, vector<2x32x256xf32>
    %cst = arith.constant dense<0.000000e+00> : vector<2x32xf32>
    %1 = vector.multi_reduction <add>, %0, %cst [2] : vector<2x32x256xf32> to vector<2x32xf32>
    %cst_2 = arith.constant 3.906250e-03 : f32
    %2 = vector.broadcast %cst_2 : f32 to vector<2x32xf32>
    %3 = arith.mulf %1, %2 : vector<2x32xf32>
    %4 = vector.shape_cast %3 : vector<2x32xf32> to vector<2x1x32xf32>
    %c0_3 = arith.constant 0 : index
    %c0_4 = arith.constant 0 : index
    %5 = vector.load %arg2[%c0_3, %c0_4] : memref<2x32xf32, #tpu.memory_space<vmem>>, vector<2x32xf32>
    %6 = vector.shape_cast %5 : vector<2x32xf32> to vector<1x2x32xf32>
    %7 = vector.broadcast %4 : vector<2x1x32xf32> to vector<2x2x32xf32>
    %8 = vector.broadcast %6 : vector<1x2x32xf32> to vector<2x2x32xf32>
    %9 = arith.mulf %7, %8 : vector<2x2x32xf32>
    %cst_5 = arith.constant dense<0.000000e+00> : vector<2x2xf32>
    %10 = vector.multi_reduction <add>, %9, %cst_5 [2] : vector<2x2x32xf32> to vector<2x2xf32>
    %cst_6 = arith.constant 0.000000e+00 : f32
    %11 = vector.broadcast %cst_6 : f32 to vector<2x2xf32>
    %12 = arith.maximumf %10, %11 : vector<2x2xf32>
    %13 = vector.shape_cast %12 : vector<2x2xf32> to vector<2x1x2xf32>
    %c0_7 = arith.constant 0 : index
    %c0_8 = arith.constant 0 : index
    %14 = vector.load %arg3[%c0_7, %c0_8] : memref<32x2xf32, #tpu.memory_space<vmem>>, vector<32x2xf32>
    %15 = vector.shape_cast %14 : vector<32x2xf32> to vector<1x32x2xf32>
    %16 = vector.broadcast %13 : vector<2x1x2xf32> to vector<2x32x2xf32>
    %17 = vector.broadcast %15 : vector<1x32x2xf32> to vector<2x32x2xf32>
    %18 = arith.mulf %16, %17 : vector<2x32x2xf32>
    %cst_9 = arith.constant dense<0.000000e+00> : vector<2x32xf32>
    %19 = vector.multi_reduction <add>, %18, %cst_9 [2] : vector<2x32x2xf32> to vector<2x32xf32>
    %20 = arith.negf %19 : vector<2x32xf32>
    %21 = math.exp %20 : vector<2x32xf32>
    %cst_10 = arith.constant 1.000000e+00 : f32
    %22 = vector.broadcast %cst_10 : f32 to vector<2x32xf32>
    %23 = arith.addf %22, %21 : vector<2x32xf32>
    %24 = arith.divf %22, %23 : vector<2x32xf32>
    %25 = vector.shape_cast %24 : vector<2x32xf32> to vector<2x32x1xf32>
    %c0_11 = arith.constant 0 : index
    %c0_12 = arith.constant 0 : index
    %26 = vector.load %arg4[%c0_11, %c0_12] : memref<32x1xf32, #tpu.memory_space<vmem>>, vector<32x1xf32>
    %27 = vector.shape_cast %26 : vector<32x1xf32> to vector<1x32x1xf32>
    %28 = vector.broadcast %27 : vector<1x32x1xf32> to vector<2x32x256xf32>
    %29 = arith.mulf %0, %28 : vector<2x32x256xf32>
    %cst_13 = arith.constant dense<0.000000e+00> : vector<2x256xf32>
    %30 = vector.multi_reduction <add>, %29, %cst_13 [1] : vector<2x32x256xf32> to vector<2x256xf32>
    %31 = vector.shape_cast %30 : vector<2x256xf32> to vector<2x1x256xf32>
    %c0_14 = arith.constant 0 : index
    %32 = memref.load %arg5[%c0_14] : memref<1xf32, #tpu.memory_space<smem>>
    %33 = vector.broadcast %32 : f32 to vector<2x1x256xf32>
    %34 = arith.addf %31, %33 : vector<2x1x256xf32>
    %35 = arith.negf %34 : vector<2x1x256xf32>
    %36 = math.exp %35 : vector<2x1x256xf32>
    %cst_15 = arith.constant 1.000000e+00 : f32
    %37 = vector.broadcast %cst_15 : f32 to vector<2x1x256xf32>
    %38 = arith.addf %37, %36 : vector<2x1x256xf32>
    %39 = arith.divf %37, %38 : vector<2x1x256xf32>
    %40 = vector.broadcast %25 : vector<2x32x1xf32> to vector<2x32x256xf32>
    %41 = vector.broadcast %39 : vector<2x1x256xf32> to vector<2x32x256xf32>
    %42 = arith.addf %40, %41 : vector<2x32x256xf32>
    %43 = arith.mulf %0, %42 : vector<2x32x256xf32>
    %c0_16 = arith.constant 0 : index
    %c0_17 = arith.constant 0 : index
    %c0_18 = arith.constant 0 : index
    %44 = vector.load %arg6[%c0_16, %c0_17, %c0_18] : memref<2x32x256xf32, #tpu.memory_space<vmem>>, vector<2x32x256xf32>
    tpu.vector_store %arg6[%c0_16, %c0_17, %c0_18], %43 {strides = array<i32>} : memref<2x32x256xf32, #tpu.memory_space<vmem>>, vector<2x32x256xf32>,
    return
  }
  func.func @transform_0(%arg0: i32) -> (i32, i32, i32) {
    %c0_i32 = arith.constant 0 : i32
    %c0_i32_0 = arith.constant 0 : i32
    %c0_i32_1 = arith.constant 0 : i32
    return %arg0, %c0_i32, %c0_i32_0 : i32, i32, i32
  }
  func.func @transform_1(%arg0: i32) -> (i32, i32) {
    %c0_i32 = arith.constant 0 : i32
    %c0_i32_0 = arith.constant 0 : i32
    %c0_i32_1 = arith.constant 0 : i32
    return %c0_i32, %c0_i32_0 : i32, i32
  }
  func.func @transform_2(%arg0: i32) -> (i32, i32) {
    %c0_i32 = arith.constant 0 : i32
    %c0_i32_0 = arith.constant 0 : i32
    %c0_i32_1 = arith.constant 0 : i32
    return %c0_i32, %c0_i32_0 : i32, i32
  }
  func.func @transform_3(%arg0: i32) -> (i32, i32) {
    %c0_i32 = arith.constant 0 : i32
    %c0_i32_0 = arith.constant 0 : i32
    %c0_i32_1 = arith.constant 0 : i32
    return %c0_i32, %c0_i32_0 : i32, i32
  }
  func.func @transform_4(%arg0: i32) -> i32 {
    %c0_i32 = arith.constant 0 : i32
    %c0_i32_0 = arith.constant 0 : i32
    return %c0_i32 : i32
  }
  func.func @transform_5(%arg0: i32) -> (i32, i32, i32) {
    %c0_i32 = arith.constant 0 : i32
    %c0_i32_0 = arith.constant 0 : i32
    %c0_i32_1 = arith.constant 0 : i32
    return %arg0, %c0_i32, %c0_i32_0 : i32, i32, i32
  }
}

</mosaic_0001>

<llo_original>
// kernel: tpu_custom_call.1
$region0: #{tpu_custom_call.1}
  #allocation0 [shape = 'u32[]', space=smem, size = 0x4, offset = 0x4, fixed_abs, tag = 'smem constant byte address 0x4 - core index']
  #allocation1 [shape = 'u32[144,128]{1,0:T(1,128)}', space=vmem, size = 0x12000, scoped, tag = 'internal scratch']
  #allocation2 [shape = 'f32[1]{0:T(128)S(6)}', space=smem, size = 0x200, scoped, tag = 'scoped memory for tpu_custom_call.1']
  %s0 = inlined_call_operand.hbm [shape: f32[2,32,256], index: 0, kind: input, shape index: {}]
  %s1 = inlined_call_operand.hbm [shape: f32[2,32], index: 1, kind: input, shape index: {}]
  %s2 = inlined_call_operand.hbm [shape: f32[32,2], index: 2, kind: input, shape index: {}]
  %s3 = inlined_call_operand.hbm [shape: f32[32,1], index: 3, kind: input, shape index: {}]
  %s4 = inlined_call_operand.<no memory space> [shape: f32[1], index: 4, kind: input, shape index: {}]
  %s5 = inlined_call_operand.hbm [shape: f32[2,32,256], index: 5, kind: output, shape index: {}]
  %s6 = sld [smem:[#allocation0]]
  $region46: #{tpu_custom_call.1} parent=0
    _
  %s8 = ssub.s32 1, %s6
  %s9 = scalar_select 0, %s8, %s6
  %10 = sst [smem:[#allocation2]] %s4
  $region1: #{tpu_custom_call.1} parent=0
    #allocation3 [shape = 'u8[65536]{0}', space=vmem, size = 0x10000, scoped, tag = 'input window, operand 0, single buffered']
    #allocation4 [shape = 's32[1]{0}', space=sflag, size = 0x4, scoped, tag = 'scoped memory for tpu_custom_call.1']
    #allocation5 [shape = 's32[1]{0}', space=sflag, size = 0x4, scoped, tag = 'scoped memory for tpu_custom_call.1']
    #allocation6 [shape = 'u8[1024]{0}', space=vmem, size = 0x400, scoped, tag = 'input window, operand 1, single buffered']
    #allocation7 [shape = 's32[1]{0}', space=sflag, size = 0x4, scoped, tag = 'scoped memory for tpu_custom_call.1']
    #allocation8 [shape = 'u8[16384]{0}', space=vmem, size = 0x4000, scoped, tag = 'input window, operand 2, single buffered']
    #allocation9 [shape = 'u8[16384]{0}', space=vmem, size = 0x4000, scoped, tag = 'input window, operand 3, single buffered']
    #allocation10 [shape = 's32[1]{0}', space=sflag, size = 0x4, scoped, tag = 'scoped memory for tpu_custom_call.1']
    #allocation11 [shape = 'u8[65536]{0}', space=vmem, size = 0x10000, scoped, tag = 'output window, operand 0, single buffered']
    %11 = vsyncpa [#allocation4], 0
    %12 = vsyncpa [#allocation7], 0
    %13 = vsyncpa [#allocation10], 0
    %14 = vsyncpa [#allocation5], 0
    // Predicated region
    $region2: #{tpu_custom_call.1} parent=1 // pred_check
      _
    $region3: #{tpu_custom_call.1} parent=1 // pred_check_branch
      %16 = sbr.rel (0) target = $region5
    $region4: #{tpu_custom_call.1} parent=1 // pred_region
      %s18 = ssub.s32 2048, 2048
      %19 = vsyncadd [#allocation4], %s18
      %s20 = sshll.u32 [#allocation3], 4
      %s21 = int_to_ptr.vmem [resolvable:$true] %s20
      %26 = dma.hbm_to_vmem [thread:$0]  %s0, 2048, %s21, [#allocation4], 256, 256, 16
    $region5: #{tpu_custom_call.1} parent=1 // pred_fallthru
      _
    // Predicated region
    $region6: #{tpu_custom_call.1} parent=1 // pred_check
      _
    $region7: #{tpu_custom_call.1} parent=1 // pred_check_branch
      %28 = sbr.rel (0) target = $region9
    $region8: #{tpu_custom_call.1} parent=1 // pred_region
      %s30 = ssub.s32 32, 32
      %31 = vsyncadd [#allocation7], %s30
      %s33 = sshll.u32 [#allocation6], 4
      %s34 = int_to_ptr.vmem [resolvable:$true] %s33
      %36 = dma.hbm_to_vmem [thread:$0]  %s1, 32, %s34, [#allocation7]
    $region9: #{tpu_custom_call.1} parent=1 // pred_fallthru
      _
    // Predicated region
    $region10: #{tpu_custom_call.1} parent=1 // pred_check
      _
    $region11: #{tpu_custom_call.1} parent=1 // pred_check_branch
      %38 = sbr.rel (0) target = $region13
    $region12: #{tpu_custom_call.1} parent=1 // pred_region
      %s40 = ssub.s32 512, 512
      %41 = vsyncadd [#allocation7], %s40
      %s42 = sshll.u32 [#allocation8], 4
      %s43 = int_to_ptr.vmem [resolvable:$true] %s42
      %48 = dma.hbm_to_vmem [thread:$0]  %s2, 512, %s43, [#allocation7], 128, 128, 8
    $region13: #{tpu_custom_call.1} parent=1 // pred_fallthru
      _
    // Predicated region
    $region14: #{tpu_custom_call.1} parent=1 // pred_check
      _
    $region15: #{tpu_custom_call.1} parent=1 // pred_check_branch
      %50 = sbr.rel (0) target = $region17
    $region16: #{tpu_custom_call.1} parent=1 // pred_region
      %s52 = ssub.s32 512, 512
      %53 = vsyncadd [#allocation10], %s52
      %s54 = sshll.u32 [#allocation9], 4
      %s55 = int_to_ptr.vmem [resolvable:$true] %s54
      %60 = dma.hbm_to_vmem [thread:$0]  %s3, 512, %s55, [#allocation10], 128, 128, 8
    $region17: #{tpu_custom_call.1} parent=1 // pred_fallthru
      _
    // Predicated region
    $region18: #{tpu_custom_call.1} parent=1 // pred_check
      _
    $region19: #{tpu_custom_call.1} parent=1 // pred_check_branch
      %62 = sbr.rel (0) target = $region21
    $region20: #{tpu_custom_call.1} parent=1 // pred_region
      _
    $region21: #{tpu_custom_call.1} parent=1 // pred_fallthru
      _
    // Predicated region
    $region22: #{tpu_custom_call.1} parent=1 // pred_check
      _
    $region23: #{tpu_custom_call.1} parent=1 // pred_check_branch
      %64 = sbr.rel (0) target = $region25
    $region24: #{tpu_custom_call.1} parent=1 // pred_region
      %65 = dma.done [#allocation4], 2048
    $region25: #{tpu_custom_call.1} parent=1 // pred_fallthru
      _
    // Predicated region
    $region26: #{tpu_custom_call.1} parent=1 // pred_check
      _
    $region27: #{tpu_custom_call.1} parent=1 // pred_check_branch
      %67 = sbr.rel (0) target = $region29
    $region28: #{tpu_custom_call.1} parent=1 // pred_region
      %68 = dma.done [#allocation7], 32
    $region29: #{tpu_custom_call.1} parent=1 // pred_fallthru
      _
    // Predicated region
    $region30: #{tpu_custom_call.1} parent=1 // pred_check
      _
    $region31: #{tpu_custom_call.1} parent=1 // pred_check_branch
      %70 = sbr.rel (0) target = $region33
    $region32: #{tpu_custom_call.1} parent=1 // pred_region
      %71 = dma.done [#allocation7], 512
    $region33: #{tpu_custom_call.1} parent=1 // pred_fallthru
      _
    // Predicated region
    $region34: #{tpu_custom_call.1} parent=1 // pred_check
      _
    $region35: #{tpu_custom_call.1} parent=1 // pred_check_branch
      %73 = sbr.rel (0) target = $region37
    $region36: #{tpu_custom_call.1} parent=1 // pred_region
      %74 = dma.done [#allocation10], 512
    $region37: #{tpu_custom_call.1} parent=1 // pred_fallthru
      _
    %v75 = vld [vmem:[#allocation3] sm:$0xff]
    %v76 = vld [vmem:[#allocation3 + $0x8] sm:$0xff]
    %v77 = vld [vmem:[#allocation3 + $0x10] sm:$0xff]
    %v78 = vld [vmem:[#allocation3 + $0x18] sm:$0xff]
    %v79 = vld [vmem:[#allocation3 + $0x20] sm:$0xff]
    %v80 = vld [vmem:[#allocation3 + $0x28] sm:$0xff]
    %v81 = vld [vmem:[#allocation3 + $0x30] sm:$0xff]
    %v82 = vld [vmem:[#allocation3 + $0x38] sm:$0xff]
    %v83 = vld [vmem:[#allocation3 + $0x40] sm:$0xff]
    %v84 = vld [vmem:[#allocation3 + $0x48] sm:$0xff]
    %v85 = vld [vmem:[#allocation3 + $0x50] sm:$0xff]
    %v86 = vld [vmem:[#allocation3 + $0x58] sm:$0xff]
    %v87 = vld [vmem:[#allocation3 + $0x60] sm:$0xff]
    %v88 = vld [vmem:[#allocation3 + $0x68] sm:$0xff]
    %v89 = vld [vmem:[#allocation3 + $0x70] sm:$0xff]
    %v90 = vld [vmem:[#allocation3 + $0x78] sm:$0xff]
    %v91 = vadd.f32 %v75, %v76
    %92 = vadd.xlane.f32.xlu0 %v91
    %v93 = vpop.xlane.xlu0 %92
    %v94 = vadd.f32 %v77, %v78
    %95 = vadd.xlane.f32.xlu0 %v94
    %v96 = vpop.xlane.xlu0 %95
    %v97 = vadd.f32 %v79, %v80
    %98 = vadd.xlane.f32.xlu0 %v97
    %v99 = vpop.xlane.xlu0 %98
    %v100 = vadd.f32 %v81, %v82
    %101 = vadd.xlane.f32.xlu0 %v100
    %v102 = vpop.xlane.xlu0 %101
    %v103 = vadd.f32 %v83, %v84
    %104 = vadd.xlane.f32.xlu0 %v103
    %v105 = vpop.xlane.xlu0 %104
    %v106 = vadd.f32 %v85, %v86
    %107 = vadd.xlane.f32.xlu0 %v106
    %v108 = vpop.xlane.xlu0 %107
    %v109 = vadd.f32 %v87, %v88
    %110 = vadd.xlane.f32.xlu0 %v109
    %v111 = vpop.xlane.xlu0 %110
    %v112 = vadd.f32 %v89, %v90
    %113 = vadd.xlane.f32.xlu0 %v112
    %v114 = vpop.xlane.xlu0 %113
    %v115 = vmul.f32 %v93, 0.00390625
    %v116 = vmul.f32 %v96, 0.00390625
    %v117 = vmul.f32 %v99, 0.00390625
    %v118 = vmul.f32 %v102, 0.00390625
    %v119 = vmul.f32 %v105, 0.00390625
    %v120 = vmul.f32 %v108, 0.00390625
    %v121 = vmul.f32 %v111, 0.00390625
    %v122 = vmul.f32 %v114, 0.00390625
    %v123 = vld [vmem:[#allocation6] sm:$0x3]
    %v125 = vlaneseq
    %v126 = vshrl.u32 %v125, 7
    %v127 = vsub.s32 0, %v126
    %v128 = vrot.slane %v123, %v127
    %130 = vbcast.lane.b32.xlu0 %v128, 256
    %v131 = vpop.permute.xlu0 %130
    %s133 = sor.u32 256, 8
    %134 = vbcast.lane.b32.xlu0 %v128, %s133
    %v135 = vpop.permute.xlu0 %134
    %s137 = sor.u32 256, 16
    %138 = vbcast.lane.b32.xlu0 %v128, %s137
    %v139 = vpop.permute.xlu0 %138
    %s141 = sor.u32 256, 24
    %142 = vbcast.lane.b32.xlu0 %v128, %s141
    %v143 = vpop.permute.xlu0 %142
    %v144 = vlaneseq
    %v145 = vshrl.u32 %v144, 7
    %v146 = vsub.s32 1, %v145
    %v147 = vrot.slane %v123, %v146
    %149 = vbcast.lane.b32.xlu0 %v147, 256
    %v150 = vpop.permute.xlu0 %149
    %s152 = sor.u32 256, 8
    %153 = vbcast.lane.b32.xlu0 %v147, %s152
    %v154 = vpop.permute.xlu0 %153
    %s156 = sor.u32 256, 16
    %157 = vbcast.lane.b32.xlu0 %v147, %s156
    %v158 = vpop.permute.xlu0 %157
    %s160 = sor.u32 256, 24
    %161 = vbcast.lane.b32.xlu0 %v147, %s160
    %v162 = vpop.permute.xlu0 %161
    %v171 = vmul.f32 %v115, %v131
    %v172 = vmul.f32 %v116, %v135
    %v173 = vmul.f32 %v117, %v139
    %v174 = vmul.f32 %v118, %v143
    %v175 = vmul.f32 %v115, %v150
    %v176 = vmul.f32 %v116, %v154
    %v177 = vmul.f32 %v117, %v158
    %v178 = vmul.f32 %v118, %v162
    %v179 = vmul.f32 %v119, %v131
    %v180 = vmul.f32 %v120, %v135
    %v181 = vmul.f32 %v121, %v139
    %v182 = vmul.f32 %v122, %v143
    %v183 = vmul.f32 %v119, %v150
    %v184 = vmul.f32 %v120, %v154
    %v185 = vmul.f32 %v121, %v158
    %v186 = vmul.f32 %v122, %v162
    %203 = vset.pattern.permute.xlu0 0
    %204 = vperm.xlu0 %203, %v171
    %v205 = vpop.permute.xlu0 %204
    %206 = vset.pattern.permute.xlu0 0
    %207 = vperm.xlu0 %206, %v172
    %v208 = vpop.permute.xlu0 %207
    %209 = vset.pattern.permute.xlu0 0
    %210 = vperm.xlu0 %209, %v173
    %v211 = vpop.permute.xlu0 %210
    %212 = vset.pattern.permute.xlu0 0
    %213 = vperm.xlu0 %212, %v174
    %v214 = vpop.permute.xlu0 %213
    %215 = vset.pattern.permute.xlu0 0
    %216 = vperm.xlu0 %215, %v175
    %v217 = vpop.permute.xlu0 %216
    %218 = vset.pattern.permute.xlu0 0
    %219 = vperm.xlu0 %218, %v176
    %v220 = vpop.permute.xlu0 %219
    %221 = vset.pattern.permute.xlu0 0
    %222 = vperm.xlu0 %221, %v177
    %v223 = vpop.permute.xlu0 %222
    %224 = vset.pattern.permute.xlu0 0
    %225 = vperm.xlu0 %224, %v178
    %v226 = vpop.permute.xlu0 %225
    %227 = vset.pattern.permute.xlu0 0
    %228 = vperm.xlu0 %227, %v179
    %v229 = vpop.permute.xlu0 %228
    %230 = vset.pattern.permute.xlu0 0
    %231 = vperm.xlu0 %230, %v180
    %v232 = vpop.permute.xlu0 %231
    %233 = vset.pattern.permute.xlu0 0
    %234 = vperm.xlu0 %233, %v181
    %v235 = vpop.permute.xlu0 %234
    %236 = vset.pattern.permute.xlu0 0
    %237 = vperm.xlu0 %236, %v182
    %v238 = vpop.permute.xlu0 %237
    %239 = vset.pattern.permute.xlu0 0
    %240 = vperm.xlu0 %239, %v183
    %v241 = vpop.permute.xlu0 %240
    %242 = vset.pattern.permute.xlu0 0
    %243 = vperm.xlu0 %242, %v184
    %v244 = vpop.permute.xlu0 %243
    %245 = vset.pattern.permute.xlu0 0
    %246 = vperm.xlu0 %245, %v185
    %v247 = vpop.permute.xlu0 %246
    %248 = vset.pattern.permute.xlu0 0
    %249 = vperm.xlu0 %248, %v186
    %v250 = vpop.permute.xlu0 %249
    %v251 = vlaneseq
    %v252 = vand.u32 %v251, 127
    %v253 = vlaneseq
    %v254 = vshrl.u32 %v253, 7
    %v255 = vsub.s32 %v252, %v254
    %v256 = vrot.slane %v205, %v255
    %v257 = vadd.s32 %v252, 4294967288
    %v258 = vlaneseq
    %v259 = vshrl.u32 %v258, 7
    %v260 = vsub.s32 %v257, %v259
    %v261 = vrot.slane %v208, %v260
    %vm262 = vcmask 130112
    %v263 = vsel %vm262, %v261, %v256
    %v264 = vadd.s32 %v252, 4294967280
    %v265 = vlaneseq
    %v266 = vshrl.u32 %v265, 7
    %v267 = vsub.s32 %v264, %v266
    %v268 = vrot.slane %v211, %v267
    %vm269 = vcmask 195712
    %v270 = vsel %vm269, %v268, %v263
    %v271 = vadd.s32 %v252, 4294967272
    %v272 = vlaneseq
    %v273 = vshrl.u32 %v272, 7
    %v274 = vsub.s32 %v271, %v273
    %v275 = vrot.slane %v214, %v274
    %vm276 = vcmask 261312
    %v277 = vsel %vm276, %v275, %v270
    %v278 = vlaneseq
    %v279 = vshrl.u32 %v278, 7
    %v280 = vsub.s32 %v252, %v279
    %v281 = vrot.slane %v217, %v280
    %v282 = vlaneseq
    %v283 = vshrl.u32 %v282, 7
    %v284 = vsub.s32 %v257, %v283
    %v285 = vrot.slane %v220, %v284
    %v286 = vsel %vm262, %v285, %v281
    %v287 = vlaneseq
    %v288 = vshrl.u32 %v287, 7
    %v289 = vsub.s32 %v264, %v288
    %v290 = vrot.slane %v223, %v289
    %v291 = vsel %vm269, %v290, %v286
    %v292 = vlaneseq
    %v293 = vshrl.u32 %v292, 7
    %v294 = vsub.s32 %v271, %v293
    %v295 = vrot.slane %v226, %v294
    %v296 = vsel %vm276, %v295, %v291
    %v297 = vlaneseq
    %v298 = vshrl.u32 %v297, 7
    %v299 = vsub.s32 %v252, %v298
    %v300 = vrot.slane %v229, %v299
    %v301 = vlaneseq
    %v302 = vshrl.u32 %v301, 7
    %v303 = vsub.s32 %v257, %v302
    %v304 = vrot.slane %v232, %v303
    %v305 = vsel %vm262, %v304, %v300
    %v306 = vlaneseq
    %v307 = vshrl.u32 %v306, 7
    %v308 = vsub.s32 %v264, %v307
    %v309 = vrot.slane %v235, %v308
    %v310 = vsel %vm269, %v309, %v305
    %v311 = vlaneseq
    %v312 = vshrl.u32 %v311, 7
    %v313 = vsub.s32 %v271, %v312
    %v314 = vrot.slane %v238, %v313
    %v315 = vsel %vm276, %v314, %v310
    %v316 = vlaneseq
    %v317 = vshrl.u32 %v316, 7
    %v318 = vsub.s32 %v252, %v317
    %v319 = vrot.slane %v241, %v318
    %v320 = vlaneseq
    %v321 = vshrl.u32 %v320, 7
    %v322 = vsub.s32 %v257, %v321
    %v323 = vrot.slane %v244, %v322
    %v324 = vsel %vm262, %v323, %v319
    %v325 = vlaneseq
    %v326 = vshrl.u32 %v325, 7
    %v327 = vsub.s32 %v264, %v326
    %v328 = vrot.slane %v247, %v327
    %v329 = vsel %vm269, %v328, %v324
    %v330 = vlaneseq
    %v331 = vshrl.u32 %v330, 7
    %v332 = vsub.s32 %v271, %v331
    %v333 = vrot.slane %v250, %v332
    %v334 = vsel %vm276, %v333, %v329
    %vm335 = vcmask 1041409
    %v336 = vsel %vm335, %v296, %v277
    %v337 = vsel %vm335, %v334, %v315
    %vm340 = vcmask 254976
    %v341 = vsel %vm340, %v336, 0.0
    %342 = vadd.xlane.f32.xlu0 %v341
    %v343 = vpop.xlane.xlu0 %342
    %v344 = vsel %vm340, %v337, 0.0
    %345 = vadd.xlane.f32.xlu0 %v344
    %v346 = vpop.xlane.xlu0 %345
    %v347 = vmax.f32 %v343, 0.0
    %v348 = vmax.f32 %v346, 0.0
    %v349 = vld [vmem:[#allocation8] sm:$0xff]
    %v350 = vld [vmem:[#allocation8 + $0x8] sm:$0xff]
    %v351 = vld [vmem:[#allocation8 + $0x10] sm:$0xff]
    %v352 = vld [vmem:[#allocation8 + $0x18] sm:$0xff]
    %v357 = vlaneseq
    %v358 = vshrl.u32 %v357, 7
    %v359 = vsub.s32 0, %v358
    %v360 = vrot.slane %v349, %v359
    %362 = vbcast.lane.b32.xlu0 %v360, 256
    %v363 = vpop.permute.xlu0 %362
    %v364 = vlaneseq
    %v365 = vshrl.u32 %v364, 7
    %v366 = vsub.s32 1, %v365
    %v367 = vrot.slane %v349, %v366
    %369 = vbcast.lane.b32.xlu0 %v367, 256
    %v370 = vpop.permute.xlu0 %369
    %v371 = vlaneseq
    %v372 = vshrl.u32 %v371, 7
    %v373 = vsub.s32 2, %v372
    %v374 = vrot.slane %v349, %v373
    %376 = vbcast.lane.b32.xlu0 %v374, 256
    %v377 = vpop.permute.xlu0 %376
    %v378 = vlaneseq
    %v379 = vshrl.u32 %v378, 7
    %v380 = vsub.s32 3, %v379
    %v381 = vrot.slane %v349, %v380
    %383 = vbcast.lane.b32.xlu0 %v381, 256
    %v384 = vpop.permute.xlu0 %383
    %v385 = vlaneseq
    %v386 = vshrl.u32 %v385, 7
    %v387 = vsub.s32 4, %v386
    %v388 = vrot.slane %v349, %v387
    %390 = vbcast.lane.b32.xlu0 %v388, 256
    %v391 = vpop.permute.xlu0 %390
    %v392 = vlaneseq
    %v393 = vshrl.u32 %v392, 7
    %v394 = vsub.s32 5, %v393
    %v395 = vrot.slane %v349, %v394
    %397 = vbcast.lane.b32.xlu0 %v395, 256
    %v398 = vpop.permute.xlu0 %397
    %v399 = vlaneseq
    %v400 = vshrl.u32 %v399, 7
    %v401 = vsub.s32 6, %v400
    %v402 = vrot.slane %v349, %v401
    %404 = vbcast.lane.b32.xlu0 %v402, 256
    %v405 = vpop.permute.xlu0 %404
    %v406 = vlaneseq
    %v407 = vshrl.u32 %v406, 7
    %v408 = vsub.s32 7, %v407
    %v409 = vrot.slane %v349, %v408
    %411 = vbcast.lane.b32.xlu0 %v409, 256
    %v412 = vpop.permute.xlu0 %411
    %v413 = vlaneseq
    %v414 = vshrl.u32 %v413, 7
    %v415 = vsub.s32 0, %v414
    %v416 = vrot.slane %v350, %v415
    %418 = vbcast.lane.b32.xlu0 %v416, 256
    %v419 = vpop.permute.xlu0 %418
    %v420 = vlaneseq
    %v421 = vshrl.u32 %v420, 7
    %v422 = vsub.s32 1, %v421
    %v423 = vrot.slane %v350, %v422
    %425 = vbcast.lane.b32.xlu0 %v423, 256
    %v426 = vpop.permute.xlu0 %425
    %v427 = vlaneseq
    %v428 = vshrl.u32 %v427, 7
    %v429 = vsub.s32 2, %v428
    %v430 = vrot.slane %v350, %v429
    %432 = vbcast.lane.b32.xlu0 %v430, 256
    %v433 = vpop.permute.xlu0 %432
    %v434 = vlaneseq
    %v435 = vshrl.u32 %v434, 7
    %v436 = vsub.s32 3, %v435
    %v437 = vrot.slane %v350, %v436
    %439 = vbcast.lane.b32.xlu0 %v437, 256
    %v440 = vpop.permute.xlu0 %439
    %v441 = vlaneseq
    %v442 = vshrl.u32 %v441, 7
    %v443 = vsub.s32 4, %v442
    %v444 = vrot.slane %v350, %v443
    %446 = vbcast.lane.b32.xlu0 %v444, 256
    %v447 = vpop.permute.xlu0 %446
    %v448 = vlaneseq
    %v449 = vshrl.u32 %v448, 7
    %v450 = vsub.s32 5, %v449
    %v451 = vrot.slane %v350, %v450
    %453 = vbcast.lane.b32.xlu0 %v451, 256
    %v454 = vpop.permute.xlu0 %453
    %v455 = vlaneseq
    %v456 = vshrl.u32 %v455, 7
    %v457 = vsub.s32 6, %v456
    %v458 = vrot.slane %v350, %v457
    %460 = vbcast.lane.b32.xlu0 %v458, 256
    %v461 = vpop.permute.xlu0 %460
    %v462 = vlaneseq
    %v463 = vshrl.u32 %v462, 7
    %v464 = vsub.s32 7, %v463
    %v465 = vrot.slane %v350, %v464
    %467 = vbcast.lane.b32.xlu0 %v465, 256
    %v468 = vpop.permute.xlu0 %467
    %v469 = vlaneseq
    %v470 = vshrl.u32 %v469, 7
    %v471 = vsub.s32 0, %v470
    %v472 = vrot.slane %v351, %v471
    %474 = vbcast.lane.b32.xlu0 %v472, 256
    %v475 = vpop.permute.xlu0 %474
    %v476 = vlaneseq
    %v477 = vshrl.u32 %v476, 7
    %v478 = vsub.s32 1, %v477
    %v479 = vrot.slane %v351, %v478
    %481 = vbcast.lane.b32.xlu0 %v479, 256
    %v482 = vpop.permute.xlu0 %481
    %v483 = vlaneseq
    %v484 = vshrl.u32 %v483, 7
    %v485 = vsub.s32 2, %v484
    %v486 = vrot.slane %v351, %v485
    %488 = vbcast.lane.b32.xlu0 %v486, 256
    %v489 = vpop.permute.xlu0 %488
    %v490 = vlaneseq
    %v491 = vshrl.u32 %v490, 7
    %v492 = vsub.s32 3, %v491
    %v493 = vrot.slane %v351, %v492
    %495 = vbcast.lane.b32.xlu0 %v493, 256
    %v496 = vpop.permute.xlu0 %495
    %v497 = vlaneseq
    %v498 = vshrl.u32 %v497, 7
    %v499 = vsub.s32 4, %v498
    %v500 = vrot.slane %v351, %v499
    %502 = vbcast.lane.b32.xlu0 %v500, 256
    %v503 = vpop.permute.xlu0 %502
    %v504 = vlaneseq
    %v505 = vshrl.u32 %v504, 7
    %v506 = vsub.s32 5, %v505
    %v507 = vrot.slane %v351, %v506
    %509 = vbcast.lane.b32.xlu0 %v507, 256
    %v510 = vpop.permute.xlu0 %509
    %v511 = vlaneseq
    %v512 = vshrl.u32 %v511, 7
    %v513 = vsub.s32 6, %v512
    %v514 = vrot.slane %v351, %v513
    %516 = vbcast.lane.b32.xlu0 %v514, 256
    %v517 = vpop.permute.xlu0 %516
    %v518 = vlaneseq
    %v519 = vshrl.u32 %v518, 7
    %v520 = vsub.s32 7, %v519
    %v521 = vrot.slane %v351, %v520
    %523 = vbcast.lane.b32.xlu0 %v521, 256
    %v524 = vpop.permute.xlu0 %523
    %v525 = vlaneseq
    %v526 = vshrl.u32 %v525, 7
    %v527 = vsub.s32 0, %v526
    %v528 = vrot.slane %v352, %v527
    %530 = vbcast.lane.b32.xlu0 %v528, 256
    %v531 = vpop.permute.xlu0 %530
    %v532 = vlaneseq
    %v533 = vshrl.u32 %v532, 7
    %v534 = vsub.s32 1, %v533
    %v535 = vrot.slane %v352, %v534
    %537 = vbcast.lane.b32.xlu0 %v535, 256
    %v538 = vpop.permute.xlu0 %537
    %v539 = vlaneseq
    %v540 = vshrl.u32 %v539, 7
    %v541 = vsub.s32 2, %v540
    %v542 = vrot.slane %v352, %v541
    %544 = vbcast.lane.b32.xlu0 %v542, 256
    %v545 = vpop.permute.xlu0 %544
    %v546 = vlaneseq
    %v547 = vshrl.u32 %v546, 7
    %v548 = vsub.s32 3, %v547
    %v549 = vrot.slane %v352, %v548
    %551 = vbcast.lane.b32.xlu0 %v549, 256
    %v552 = vpop.permute.xlu0 %551
    %v553 = vlaneseq
    %v554 = vshrl.u32 %v553, 7
    %v555 = vsub.s32 4, %v554
    %v556 = vrot.slane %v352, %v555
    %558 = vbcast.lane.b32.xlu0 %v556, 256
    %v559 = vpop.permute.xlu0 %558
    %v560 = vlaneseq
    %v561 = vshrl.u32 %v560, 7
    %v562 = vsub.s32 5, %v561
    %v563 = vrot.slane %v352, %v562
    %565 = vbcast.lane.b32.xlu0 %v563, 256
    %v566 = vpop.permute.xlu0 %565
    %v567 = vlaneseq
    %v568 = vshrl.u32 %v567, 7
    %v569 = vsub.s32 6, %v568
    %v570 = vrot.slane %v352, %v569
    %572 = vbcast.lane.b32.xlu0 %v570, 256
    %v573 = vpop.permute.xlu0 %572
    %v574 = vlaneseq
    %v575 = vshrl.u32 %v574, 7
    %v576 = vsub.s32 7, %v575
    %v577 = vrot.slane %v352, %v576
    %579 = vbcast.lane.b32.xlu0 %v577, 256
    %v580 = vpop.permute.xlu0 %579
    %v613 = vmul.f32 %v347, %v363
    %v614 = vmul.f32 %v347, %v370
    %v615 = vmul.f32 %v347, %v377
    %v616 = vmul.f32 %v347, %v384
    %v617 = vmul.f32 %v347, %v391
    %v618 = vmul.f32 %v347, %v398
    %v619 = vmul.f32 %v347, %v405
    %v620 = vmul.f32 %v347, %v412
    %v621 = vmul.f32 %v347, %v419
    %v622 = vmul.f32 %v347, %v426
    %v623 = vmul.f32 %v347, %v433
    %v624 = vmul.f32 %v347, %v440
    %v625 = vmul.f32 %v347, %v447
    %v626 = vmul.f32 %v347, %v454
    %v627 = vmul.f32 %v347, %v461
    %v628 = vmul.f32 %v347, %v468
    %v629 = vmul.f32 %v347, %v475
    %v630 = vmul.f32 %v347, %v482
    %v631 = vmul.f32 %v347, %v489
    %v632 = vmul.f32 %v347, %v496
    %v633 = vmul.f32 %v347, %v503
    %v634 = vmul.f32 %v347, %v510
    %v635 = vmul.f32 %v347, %v517
    %v636 = vmul.f32 %v347, %v524
    %v637 = vmul.f32 %v347, %v531
    %v638 = vmul.f32 %v347, %v538
    %v639 = vmul.f32 %v347, %v545
    %v640 = vmul.f32 %v347, %v552
    %v641 = vmul.f32 %v347, %v559
    %v642 = vmul.f32 %v347, %v566
    %v643 = vmul.f32 %v347, %v573
    %v644 = vmul.f32 %v347, %v580
    %v645 = vmul.f32 %v348, %v363
    %v646 = vmul.f32 %v348, %v370
    %v647 = vmul.f32 %v348, %v377
    %v648 = vmul.f32 %v348, %v384
    %v649 = vmul.f32 %v348, %v391
    %v650 = vmul.f32 %v348, %v398
    %v651 = vmul.f32 %v348, %v405
    %v652 = vmul.f32 %v348, %v412
    %v653 = vmul.f32 %v348, %v419
    %v654 = vmul.f32 %v348, %v426
    %v655 = vmul.f32 %v348, %v433
    %v656 = vmul.f32 %v348, %v440
    %v657 = vmul.f32 %v348, %v447
    %v658 = vmul.f32 %v348, %v454
    %v659 = vmul.f32 %v348, %v461
    %v660 = vmul.f32 %v348, %v468
    %v661 = vmul.f32 %v348, %v475
    %v662 = vmul.f32 %v348, %v482
    %v663 = vmul.f32 %v348, %v489
    %v664 = vmul.f32 %v348, %v496
    %v665 = vmul.f32 %v348, %v503
    %v666 = vmul.f32 %v348, %v510
    %v667 = vmul.f32 %v348, %v517
    %v668 = vmul.f32 %v348, %v524
    %v669 = vmul.f32 %v348, %v531
    %v670 = vmul.f32 %v348, %v538
    %v671 = vmul.f32 %v348, %v545
    %v672 = vmul.f32 %v348, %v552
    %v673 = vmul.f32 %v348, %v559
    %v674 = vmul.f32 %v348, %v566
    %v675 = vmul.f32 %v348, %v573
    %v676 = vmul.f32 %v348, %v580
    %741 = vset.pattern.permute.xlu0 0
    %742 = vperm.xlu0 %741, %v613
    %v743 = vpop.permute.xlu0 %742
    %744 = vset.pattern.permute.xlu0 0
    %745 = vperm.xlu0 %744, %v614
    %v746 = vpop.permute.xlu0 %745
    %747 = vset.pattern.permute.xlu0 0
    %748 = vperm.xlu0 %747, %v615
    %v749 = vpop.permute.xlu0 %748
    %750 = vset.pattern.permute.xlu0 0
    %751 = vperm.xlu0 %750, %v616
    %v752 = vpop.permute.xlu0 %751
    %753 = vset.pattern.permute.xlu0 0
    %754 = vperm.xlu0 %753, %v617
    %v755 = vpop.permute.xlu0 %754
    %756 = vset.pattern.permute.xlu0 0
    %757 = vperm.xlu0 %756, %v618
    %v758 = vpop.permute.xlu0 %757
    %759 = vset.pattern.permute.xlu0 0
    %760 = vperm.xlu0 %759, %v619
    %v761 = vpop.permute.xlu0 %760
    %762 = vset.pattern.permute.xlu0 0
    %763 = vperm.xlu0 %762, %v620
    %v764 = vpop.permute.xlu0 %763
    %765 = vset.pattern.permute.xlu0 0
    %766 = vperm.xlu0 %765, %v621
    %v767 = vpop.permute.xlu0 %766
    %768 = vset.pattern.permute.xlu0 0
    %769 = vperm.xlu0 %768, %v622
    %v770 = vpop.permute.xlu0 %769
    %771 = vset.pattern.permute.xlu0 0
    %772 = vperm.xlu0 %771, %v623
    %v773 = vpop.permute.xlu0 %772
    %774 = vset.pattern.permute.xlu0 0
    %775 = vperm.xlu0 %774, %v624
    %v776 = vpop.permute.xlu0 %775
    %777 = vset.pattern.permute.xlu0 0
    %778 = vperm.xlu0 %777, %v625
    %v779 = vpop.permute.xlu0 %778
    %780 = vset.pattern.permute.xlu0 0
    %781 = vperm.xlu0 %780, %v626
    %v782 = vpop.permute.xlu0 %781
    %783 = vset.pattern.permute.xlu0 0
    %784 = vperm.xlu0 %783, %v627
    %v785 = vpop.permute.xlu0 %784
    %786 = vset.pattern.permute.xlu0 0
    %787 = vperm.xlu0 %786, %v628
    %v788 = vpop.permute.xlu0 %787
    %789 = vset.pattern.permute.xlu0 0
    %790 = vperm.xlu0 %789, %v629
    %v791 = vpop.permute.xlu0 %790
    %792 = vset.pattern.permute.xlu0 0
    %793 = vperm.xlu0 %792, %v630
    %v794 = vpop.permute.xlu0 %793
    %795 = vset.pattern.permute.xlu0 0
    %796 = vperm.xlu0 %795, %v631
    %v797 = vpop.permute.xlu0 %796
    %798 = vset.pattern.permute.xlu0 0
    %799 = vperm.xlu0 %798, %v632
    %v800 = vpop.permute.xlu0 %799
    %801 = vset.pattern.permute.xlu0 0
    %802 = vperm.xlu0 %801, %v633
    %v803 = vpop.permute.xlu0 %802
    %804 = vset.pattern.permute.xlu0 0
    %805 = vperm.xlu0 %804, %v634
    %v806 = vpop.permute.xlu0 %805
    %807 = vset.pattern.permute.xlu0 0
    %808 = vperm.xlu0 %807, %v635
    %v809 = vpop.permute.xlu0 %808
    %810 = vset.pattern.permute.xlu0 0
    %811 = vperm.xlu0 %810, %v636
    %v812 = vpop.permute.xlu0 %811
    %813 = vset.pattern.permute.xlu0 0
    %814 = vperm.xlu0 %813, %v637
    %v815 = vpop.permute.xlu0 %814
    %816 = vset.pattern.permute.xlu0 0
    %817 = vperm.xlu0 %816, %v638
    %v818 = vpop.permute.xlu0 %817
    %819 = vset.pattern.permute.xlu0 0
    %820 = vperm.xlu0 %819, %v639
    %v821 = vpop.permute.xlu0 %820
    %822 = vset.pattern.permute.xlu0 0
    %823 = vperm.xlu0 %822, %v640
    %v824 = vpop.permute.xlu0 %823
    %825 = vset.pattern.permute.xlu0 0
    %826 = vperm.xlu0 %825, %v641
    %v827 = vpop.permute.xlu0 %826
    %828 = vset.pattern.permute.xlu0 0
    %829 = vperm.xlu0 %828, %v642
    %v830 = vpop.permute.xlu0 %829
    %831 = vset.pattern.permute.xlu0 0
    %832 = vperm.xlu0 %831, %v643
    %v833 = vpop.permute.xlu0 %832
    %834 = vset.pattern.permute.xlu0 0
    %835 = vperm.xlu0 %834, %v644
    %v836 = vpop.permute.xlu0 %835
    %837 = vset.pattern.permute.xlu0 0
    %838 = vperm.xlu0 %837, %v645
    %v839 = vpop.permute.xlu0 %838
    %840 = vset.pattern.permute.xlu0 0
    %841 = vperm.xlu0 %840, %v646
    %v842 = vpop.permute.xlu0 %841
    %843 = vset.pattern.permute.xlu0 0
    %844 = vperm.xlu0 %843, %v647
    %v845 = vpop.permute.xlu0 %844
    %846 = vset.pattern.permute.xlu0 0
    %847 = vperm.xlu0 %846, %v648
    %v848 = vpop.permute.xlu0 %847
    %849 = vset.pattern.permute.xlu0 0
    %850 = vperm.xlu0 %849, %v649
    %v851 = vpop.permute.xlu0 %850
    %852 = vset.pattern.permute.xlu0 0
    %853 = vperm.xlu0 %852, %v650
    %v854 = vpop.permute.xlu0 %853
    %855 = vset.pattern.permute.xlu0 0
    %856 = vperm.xlu0 %855, %v651
    %v857 = vpop.permute.xlu0 %856
    %858 = vset.pattern.permute.xlu0 0
    %859 = vperm.xlu0 %858, %v652
    %v860 = vpop.permute.xlu0 %859
    %861 = vset.pattern.permute.xlu0 0
    %862 = vperm.xlu0 %861, %v653
    %v863 = vpop.permute.xlu0 %862
    %864 = vset.pattern.permute.xlu0 0
    %865 = vperm.xlu0 %864, %v654
    %v866 = vpop.permute.xlu0 %865
    %867 = vset.pattern.permute.xlu0 0
    %868 = vperm.xlu0 %867, %v655
    %v869 = vpop.permute.xlu0 %868
    %870 = vset.pattern.permute.xlu0 0
    %871 = vperm.xlu0 %870, %v656
    %v872 = vpop.permute.xlu0 %871
    %873 = vset.pattern.permute.xlu0 0
    %874 = vperm.xlu0 %873, %v657
    %v875 = vpop.permute.xlu0 %874
    %876 = vset.pattern.permute.xlu0 0
    %877 = vperm.xlu0 %876, %v658
    %v878 = vpop.permute.xlu0 %877
    %879 = vset.pattern.permute.xlu0 0
    %880 = vperm.xlu0 %879, %v659
    %v881 = vpop.permute.xlu0 %880
    %882 = vset.pattern.permute.xlu0 0
    %883 = vperm.xlu0 %882, %v660
    %v884 = vpop.permute.xlu0 %883
    %885 = vset.pattern.permute.xlu0 0
    %886 = vperm.xlu0 %885, %v661
    %v887 = vpop.permute.xlu0 %886
    %888 = vset.pattern.permute.xlu0 0
    %889 = vperm.xlu0 %888, %v662
    %v890 = vpop.permute.xlu0 %889
    %891 = vset.pattern.permute.xlu0 0
    %892 = vperm.xlu0 %891, %v663
    %v893 = vpop.permute.xlu0 %892
    %894 = vset.pattern.permute.xlu0 0
    %895 = vperm.xlu0 %894, %v664
    %v896 = vpop.permute.xlu0 %895
    %897 = vset.pattern.permute.xlu0 0
    %898 = vperm.xlu0 %897, %v665
    %v899 = vpop.permute.xlu0 %898
    %900 = vset.pattern.permute.xlu0 0
    %901 = vperm.xlu0 %900, %v666
    %v902 = vpop.permute.xlu0 %901
    %903 = vset.pattern.permute.xlu0 0
    %904 = vperm.xlu0 %903, %v667
    %v905 = vpop.permute.xlu0 %904
    %906 = vset.pattern.permute.xlu0 0
    %907 = vperm.xlu0 %906, %v668
    %v908 = vpop.permute.xlu0 %907
    %909 = vset.pattern.permute.xlu0 0
    %910 = vperm.xlu0 %909, %v669
    %v911 = vpop.permute.xlu0 %910
    %912 = vset.pattern.permute.xlu0 0
    %913 = vperm.xlu0 %912, %v670
    %v914 = vpop.permute.xlu0 %913
    %915 = vset.pattern.permute.xlu0 0
    %916 = vperm.xlu0 %915, %v671
    %v917 = vpop.permute.xlu0 %916
    %918 = vset.pattern.permute.xlu0 0
    %919 = vperm.xlu0 %918, %v672
    %v920 = vpop.permute.xlu0 %919
    %921 = vset.pattern.permute.xlu0 0
    %922 = vperm.xlu0 %921, %v673
    %v923 = vpop.permute.xlu0 %922
    %924 = vset.pattern.permute.xlu0 0
    %925 = vperm.xlu0 %924, %v674
    %v926 = vpop.permute.xlu0 %925
    %927 = vset.pattern.permute.xlu0 0
    %928 = vperm.xlu0 %927, %v675
    %v929 = vpop.permute.xlu0 %928
    %930 = vset.pattern.permute.xlu0 0
    %931 = vperm.xlu0 %930, %v676
    %v932 = vpop.permute.xlu0 %931
    %v933 = vlaneseq
    %v934 = vshrl.u32 %v933, 7
    %v935 = vsub.s32 %v252, %v934
    %v936 = vrot.slane %v743, %v935
    %v937 = vlaneseq
    %v938 = vshrl.u32 %v937, 7
    %v939 = vsub.s32 %v252, %v938
    %v940 = vrot.slane %v746, %v939
    %v941 = vlaneseq
    %v942 = vshrl.u32 %v941, 7
    %v943 = vsub.s32 %v252, %v942
    %v944 = vrot.slane %v749, %v943
    %v945 = vlaneseq
    %v946 = vshrl.u32 %v945, 7
    %v947 = vsub.s32 %v252, %v946
    %v948 = vrot.slane %v752, %v947
    %v949 = vlaneseq
    %v950 = vshrl.u32 %v949, 7
    %v951 = vsub.s32 %v252, %v950
    %v952 = vrot.slane %v755, %v951
    %v953 = vlaneseq
    %v954 = vshrl.u32 %v953, 7
    %v955 = vsub.s32 %v252, %v954
    %v956 = vrot.slane %v758, %v955
    %v957 = vlaneseq
    %v958 = vshrl.u32 %v957, 7
    %v959 = vsub.s32 %v252, %v958
    %v960 = vrot.slane %v761, %v959
    %v961 = vlaneseq
    %v962 = vshrl.u32 %v961, 7
    %v963 = vsub.s32 %v252, %v962
    %v964 = vrot.slane %v764, %v963
    %v965 = vlaneseq
    %v966 = vshrl.u32 %v965, 7
    %v967 = vsub.s32 %v252, %v966
    %v968 = vrot.slane %v767, %v967
    %v969 = vlaneseq
    %v970 = vshrl.u32 %v969, 7
    %v971 = vsub.s32 %v252, %v970
    %v972 = vrot.slane %v770, %v971
    %v973 = vlaneseq
    %v974 = vshrl.u32 %v973, 7
    %v975 = vsub.s32 %v252, %v974
    %v976 = vrot.slane %v773, %v975
    %v977 = vlaneseq
    %v978 = vshrl.u32 %v977, 7
    %v979 = vsub.s32 %v252, %v978
    %v980 = vrot.slane %v776, %v979
    %v981 = vlaneseq
    %v982 = vshrl.u32 %v981, 7
    %v983 = vsub.s32 %v252, %v982
    %v984 = vrot.slane %v779, %v983
    %v985 = vlaneseq
    %v986 = vshrl.u32 %v985, 7
    %v987 = vsub.s32 %v252, %v986
    %v988 = vrot.slane %v782, %v987
    %v989 = vlaneseq
    %v990 = vshrl.u32 %v989, 7
    %v991 = vsub.s32 %v252, %v990
    %v992 = vrot.slane %v785, %v991
    %v993 = vlaneseq
    %v994 = vshrl.u32 %v993, 7
    %v995 = vsub.s32 %v252, %v994
    %v996 = vrot.slane %v788, %v995
    %v997 = vlaneseq
    %v998 = vshrl.u32 %v997, 7
    %v999 = vsub.s32 %v252, %v998
    %v1000 = vrot.slane %v791, %v999
    %v1001 = vlaneseq
    %v1002 = vshrl.u32 %v1001, 7
    %v1003 = vsub.s32 %v252, %v1002
    %v1004 = vrot.slane %v794, %v1003
    %v1005 = vlaneseq
    %v1006 = vshrl.u32 %v1005, 7
    %v1007 = vsub.s32 %v252, %v1006
    %v1008 = vrot.slane %v797, %v1007
    %v1009 = vlaneseq
    %v1010 = vshrl.u32 %v1009, 7
    %v1011 = vsub.s32 %v252, %v1010
    %v1012 = vrot.slane %v800, %v1011
    %v1013 = vlaneseq
    %v1014 = vshrl.u32 %v1013, 7
    %v1015 = vsub.s32 %v252, %v1014
    %v1016 = vrot.slane %v803, %v1015
    %v1017 = vlaneseq
    %v1018 = vshrl.u32 %v1017, 7
    %v1019 = vsub.s32 %v252, %v1018
    %v1020 = vrot.slane %v806, %v1019
    %v1021 = vlaneseq
    %v1022 = vshrl.u32 %v1021, 7
    %v1023 = vsub.s32 %v252, %v1022
    %v1024 = vrot.slane %v809, %v1023
    %v1025 = vlaneseq
    %v1026 = vshrl.u32 %v1025, 7
    %v1027 = vsub.s32 %v252, %v1026
    %v1028 = vrot.slane %v812, %v1027
    %v1029 = vlaneseq
    %v1030 = vshrl.u32 %v1029, 7
    %v1031 = vsub.s32 %v252, %v1030
    %v1032 = vrot.slane %v815, %v1031
    %v1033 = vlaneseq
    %v1034 = vshrl.u32 %v1033, 7
    %v1035 = vsub.s32 %v252, %v1034
    %v1036 = vrot.slane %v818, %v1035
    %v1037 = vlaneseq
    %v1038 = vshrl.u32 %v1037, 7
    %v1039 = vsub.s32 %v252, %v1038
    %v1040 = vrot.slane %v821, %v1039
    %v1041 = vlaneseq
    %v1042 = vshrl.u32 %v1041, 7
    %v1043 = vsub.s32 %v252, %v1042
    %v1044 = vrot.slane %v824, %v1043
    %v1045 = vlaneseq
    %v1046 = vshrl.u32 %v1045, 7
    %v1047 = vsub.s32 %v252, %v1046
    %v1048 = vrot.slane %v827, %v1047
    %v1049 = vlaneseq
    %v1050 = vshrl.u32 %v1049, 7
    %v1051 = vsub.s32 %v252, %v1050
    %v1052 = vrot.slane %v830, %v1051
    %v1053 = vlaneseq
    %v1054 = vshrl.u32 %v1053, 7
    %v1055 = vsub.s32 %v252, %v1054
    %v1056 = vrot.slane %v833, %v1055
    %v1057 = vlaneseq
    %v1058 = vshrl.u32 %v1057, 7
    %v1059 = vsub.s32 %v252, %v1058
    %v1060 = vrot.slane %v836, %v1059
    %v1061 = vlaneseq
    %v1062 = vshrl.u32 %v1061, 7
    %v1063 = vsub.s32 %v252, %v1062
    %v1064 = vrot.slane %v839, %v1063
    %v1065 = vlaneseq
    %v1066 = vshrl.u32 %v1065, 7
    %v1067 = vsub.s32 %v252, %v1066
    %v1068 = vrot.slane %v842, %v1067
    %v1069 = vlaneseq
    %v1070 = vshrl.u32 %v1069, 7
    %v1071 = vsub.s32 %v252, %v1070
    %v1072 = vrot.slane %v845, %v1071
    %v1073 = vlaneseq
    %v1074 = vshrl.u32 %v1073, 7
    %v1075 = vsub.s32 %v252, %v1074
    %v1076 = vrot.slane %v848, %v1075
    %v1077 = vlaneseq
    %v1078 = vshrl.u32 %v1077, 7
    %v1079 = vsub.s32 %v252, %v1078
    %v1080 = vrot.slane %v851, %v1079
    %v1081 = vlaneseq
    %v1082 = vshrl.u32 %v1081, 7
    %v1083 = vsub.s32 %v252, %v1082
    %v1084 = vrot.slane %v854, %v1083
    %v1085 = vlaneseq
    %v1086 = vshrl.u32 %v1085, 7
    %v1087 = vsub.s32 %v252, %v1086
    %v1088 = vrot.slane %v857, %v1087
    %v1089 = vlaneseq
    %v1090 = vshrl.u32 %v1089, 7
    %v1091 = vsub.s32 %v252, %v1090
    %v1092 = vrot.slane %v860, %v1091
    %v1093 = vlaneseq
    %v1094 = vshrl.u32 %v1093, 7
    %v1095 = vsub.s32 %v252, %v1094
    %v1096 = vrot.slane %v863, %v1095
    %v1097 = vlaneseq
    %v1098 = vshrl.u32 %v1097, 7
    %v1099 = vsub.s32 %v252, %v1098
    %v1100 = vrot.slane %v866, %v1099
    %v1101 = vlaneseq
    %v1102 = vshrl.u32 %v1101, 7
    %v1103 = vsub.s32 %v252, %v1102
    %v1104 = vrot.slane %v869, %v1103
    %v1105 = vlaneseq
    %v1106 = vshrl.u32 %v1105, 7
    %v1107 = vsub.s32 %v252, %v1106
    %v1108 = vrot.slane %v872, %v1107
    %v1109 = vlaneseq
    %v1110 = vshrl.u32 %v1109, 7
    %v1111 = vsub.s32 %v252, %v1110
    %v1112 = vrot.slane %v875, %v1111
    %v1113 = vlaneseq
    %v1114 = vshrl.u32 %v1113, 7
    %v1115 = vsub.s32 %v252, %v1114
    %v1116 = vrot.slane %v878, %v1115
    %v1117 = vlaneseq
    %v1118 = vshrl.u32 %v1117, 7
    %v1119 = vsub.s32 %v252, %v1118
    %v1120 = vrot.slane %v881, %v1119
    %v1121 = vlaneseq
    %v1122 = vshrl.u32 %v1121, 7
    %v1123 = vsub.s32 %v252, %v1122
    %v1124 = vrot.slane %v884, %v1123
    %v1125 = vlaneseq
    %v1126 = vshrl.u32 %v1125, 7
    %v1127 = vsub.s32 %v252, %v1126
    %v1128 = vrot.slane %v887, %v1127
    %v1129 = vlaneseq
    %v1130 = vshrl.u32 %v1129, 7
    %v1131 = vsub.s32 %v252, %v1130
    %v1132 = vrot.slane %v890, %v1131
    %v1133 = vlaneseq
    %v1134 = vshrl.u32 %v1133, 7
    %v1135 = vsub.s32 %v252, %v1134
    %v1136 = vrot.slane %v893, %v1135
    %v1137 = vlaneseq
    %v1138 = vshrl.u32 %v1137, 7
    %v1139 = vsub.s32 %v252, %v1138
    %v1140 = vrot.slane %v896, %v1139
    %v1141 = vlaneseq
    %v1142 = vshrl.u32 %v1141, 7
    %v1143 = vsub.s32 %v252, %v1142
    %v1144 = vrot.slane %v899, %v1143
    %v1145 = vlaneseq
    %v1146 = vshrl.u32 %v1145, 7
    %v1147 = vsub.s32 %v252, %v1146
    %v1148 = vrot.slane %v902, %v1147
    %v1149 = vlaneseq
    %v1150 = vshrl.u32 %v1149, 7
    %v1151 = vsub.s32 %v252, %v1150
    %v1152 = vrot.slane %v905, %v1151
    %v1153 = vlaneseq
    %v1154 = vshrl.u32 %v1153, 7
    %v1155 = vsub.s32 %v252, %v1154
    %v1156 = vrot.slane %v908, %v1155
    %v1157 = vlaneseq
    %v1158 = vshrl.u32 %v1157, 7
    %v1159 = vsub.s32 %v252, %v1158
    %v1160 = vrot.slane %v911, %v1159
    %v1161 = vlaneseq
    %v1162 = vshrl.u32 %v1161, 7
    %v1163 = vsub.s32 %v252, %v1162
    %v1164 = vrot.slane %v914, %v1163
    %v1165 = vlaneseq
    %v1166 = vshrl.u32 %v1165, 7
    %v1167 = vsub.s32 %v252, %v1166
    %v1168 = vrot.slane %v917, %v1167
    %v1169 = vlaneseq
    %v1170 = vshrl.u32 %v1169, 7
    %v1171 = vsub.s32 %v252, %v1170
    %v1172 = vrot.slane %v920, %v1171
    %v1173 = vlaneseq
    %v1174 = vshrl.u32 %v1173, 7
    %v1175 = vsub.s32 %v252, %v1174
    %v1176 = vrot.slane %v923, %v1175
    %v1177 = vlaneseq
    %v1178 = vshrl.u32 %v1177, 7
    %v1179 = vsub.s32 %v252, %v1178
    %v1180 = vrot.slane %v926, %v1179
    %v1181 = vlaneseq
    %v1182 = vshrl.u32 %v1181, 7
    %v1183 = vsub.s32 %v252, %v1182
    %v1184 = vrot.slane %v929, %v1183
    %v1185 = vlaneseq
    %v1186 = vshrl.u32 %v1185, 7
    %v1187 = vsub.s32 %v252, %v1186
    %v1188 = vrot.slane %v932, %v1187
    %v1189 = vsel %vm335, %v940, %v936
    %vm1190 = vcmask 1042434
    %v1191 = vsel %vm1190, %v944, %v1189
    %vm1192 = vcmask 1043459
    %v1193 = vsel %vm1192, %v948, %v1191
    %vm1194 = vcmask 1044484
    %v1195 = vsel %vm1194, %v952, %v1193
    %vm1196 = vcmask 1045509
    %v1197 = vsel %vm1196, %v956, %v1195
    %vm1198 = vcmask 1046534
    %v1199 = vsel %vm1198, %v960, %v1197
    %vm1200 = vcmask 1047559
    %v1201 = vsel %vm1200, %v964, %v1199
    %v1202 = vsel %vm335, %v972, %v968
    %v1203 = vsel %vm1190, %v976, %v1202
    %v1204 = vsel %vm1192, %v980, %v1203
    %v1205 = vsel %vm1194, %v984, %v1204
    %v1206 = vsel %vm1196, %v988, %v1205
    %v1207 = vsel %vm1198, %v992, %v1206
    %v1208 = vsel %vm1200, %v996, %v1207
    %v1209 = vsel %vm335, %v1004, %v1000
    %v1210 = vsel %vm1190, %v1008, %v1209
    %v1211 = vsel %vm1192, %v1012, %v1210
    %v1212 = vsel %vm1194, %v1016, %v1211
    %v1213 = vsel %vm1196, %v1020, %v1212
    %v1214 = vsel %vm1198, %v1024, %v1213
    %v1215 = vsel %vm1200, %v1028, %v1214
    %v1216 = vsel %vm335, %v1036, %v1032
    %v1217 = vsel %vm1190, %v1040, %v1216
    %v1218 = vsel %vm1192, %v1044, %v1217
    %v1219 = vsel %vm1194, %v1048, %v1218
    %v1220 = vsel %vm1196, %v1052, %v1219
    %v1221 = vsel %vm1198, %v1056, %v1220
    %v1222 = vsel %vm1200, %v1060, %v1221
    %v1223 = vsel %vm335, %v1068, %v1064
    %v1224 = vsel %vm1190, %v1072, %v1223
    %v1225 = vsel %vm1192, %v1076, %v1224
    %v1226 = vsel %vm1194, %v1080, %v1225
    %v1227 = vsel %vm1196, %v1084, %v1226
    %v1228 = vsel %vm1198, %v1088, %v1227
    %v1229 = vsel %vm1200, %v1092, %v1228
    %v1230 = vsel %vm335, %v1100, %v1096
    %v1231 = vsel %vm1190, %v1104, %v1230
    %v1232 = vsel %vm1192, %v1108, %v1231
    %v1233 = vsel %vm1194, %v1112, %v1232
    %v1234 = vsel %vm1196, %v1116, %v1233
    %v1235 = vsel %vm1198, %v1120, %v1234
    %v1236 = vsel %vm1200, %v1124, %v1235
    %v1237 = vsel %vm335, %v1132, %v1128
    %v1238 = vsel %vm1190, %v1136, %v1237
    %v1239 = vsel %vm1192, %v1140, %v1238
    %v1240 = vsel %vm1194, %v1144, %v1239
    %v1241 = vsel %vm1196, %v1148, %v1240
    %v1242 = vsel %vm1198, %v1152, %v1241
    %v1243 = vsel %vm1200, %v1156, %v1242
    %v1244 = vsel %vm335, %v1164, %v1160
    %v1245 = vsel %vm1190, %v1168, %v1244
    %v1246 = vsel %vm1192, %v1172, %v1245
    %v1247 = vsel %vm1194, %v1176, %v1246
    %v1248 = vsel %vm1196, %v1180, %v1247
    %v1249 = vsel %vm1198, %v1184, %v1248
    %v1250 = vsel %vm1200, %v1188, %v1249
    %vm1259 = vcmask 15360
    %v1260 = vsel %vm1259, %v1201, 0.0
    %1261 = vadd.xlane.f32.xlu0 %v1260
    %v1262 = vpop.xlane.xlu0 %1261
    %v1263 = vsel %vm1259, %v1208, 0.0
    %1264 = vadd.xlane.f32.xlu0 %v1263
    %v1265 = vpop.xlane.xlu0 %1264
    %v1266 = vsel %vm1259, %v1215, 0.0
    %1267 = vadd.xlane.f32.xlu0 %v1266
    %v1268 = vpop.xlane.xlu0 %1267
    %v1269 = vsel %vm1259, %v1222, 0.0
    %1270 = vadd.xlane.f32.xlu0 %v1269
    %v1271 = vpop.xlane.xlu0 %1270
    %v1272 = vsel %vm1259, %v1229, 0.0
    %1273 = vadd.xlane.f32.xlu0 %v1272
    %v1274 = vpop.xlane.xlu0 %1273
    %v1275 = vsel %vm1259, %v1236, 0.0
    %1276 = vadd.xlane.f32.xlu0 %v1275
    %v1277 = vpop.xlane.xlu0 %1276
    %v1278 = vsel %vm1259, %v1243, 0.0
    %1279 = vadd.xlane.f32.xlu0 %v1278
    %v1280 = vpop.xlane.xlu0 %1279
    %v1281 = vsel %vm1259, %v1250, 0.0
    %1282 = vadd.xlane.f32.xlu0 %v1281
    %v1283 = vpop.xlane.xlu0 %1282
    %v1284 = vxor.u32 %v1262, 2147483648
    %v1285 = vxor.u32 %v1265, 2147483648
    %v1286 = vxor.u32 %v1268, 2147483648
    %v1287 = vxor.u32 %v1271, 2147483648
    %v1288 = vxor.u32 %v1274, 2147483648
    %v1289 = vxor.u32 %v1277, 2147483648
    %v1290 = vxor.u32 %v1280, 2147483648
    %v1291 = vxor.u32 %v1283, 2147483648
    %v1292 = vmul.f32 %v1284, 1.442695
    %v1293 = vpow.pop %v1292
    %v1294 = vmul.f32 %v1285, 1.442695
    %v1295 = vpow.pop %v1294
    %v1296 = vmul.f32 %v1286, 1.442695
    %v1297 = vpow.pop %v1296
    %v1298 = vmul.f32 %v1287, 1.442695
    %v1299 = vpow.pop %v1298
    %v1300 = vmul.f32 %v1288, 1.442695
    %v1301 = vpow.pop %v1300
    %v1302 = vmul.f32 %v1289, 1.442695
    %v1303 = vpow.pop %v1302
    %v1304 = vmul.f32 %v1290, 1.442695
    %v1305 = vpow.pop %v1304
    %v1306 = vmul.f32 %v1291, 1.442695
    %v1307 = vpow.pop %v1306
    %v1308 = vadd.f32 %v1293, 1.0
    %v1309 = vadd.f32 %v1295, 1.0
    %v1310 = vadd.f32 %v1297, 1.0
    %v1311 = vadd.f32 %v1299, 1.0
    %v1312 = vadd.f32 %v1301, 1.0
    %v1313 = vadd.f32 %v1303, 1.0
    %v1314 = vadd.f32 %v1305, 1.0
    %v1315 = vadd.f32 %v1307, 1.0
    %v1316 = vrcp.pop %v1308
    %v1317 = vmul.f32 1.0, %v1316
    %v1318 = vrcp.pop %v1309
    %v1319 = vmul.f32 1.0, %v1318
    %v1320 = vrcp.pop %v1310
    %v1321 = vmul.f32 1.0, %v1320
    %v1322 = vrcp.pop %v1311
    %v1323 = vmul.f32 1.0, %v1322
    %v1324 = vrcp.pop %v1312
    %v1325 = vmul.f32 1.0, %v1324
    %v1326 = vrcp.pop %v1313
    %v1327 = vmul.f32 1.0, %v1326
    %v1328 = vrcp.pop %v1314
    %v1329 = vmul.f32 1.0, %v1328
    %v1330 = vrcp.pop %v1315
    %v1331 = vmul.f32 1.0, %v1330
    %v1332 = vld [vmem:[#allocation9] sm:$0xff]
    %v1333 = vld [vmem:[#allocation9 + $0x8] sm:$0xff]
    %v1334 = vld [vmem:[#allocation9 + $0x10] sm:$0xff]
    %v1335 = vld [vmem:[#allocation9 + $0x18] sm:$0xff]
    %1337 = vset.pattern.permute.xlu0 0
    %1338 = vperm.xlu0 %1337, %v1332
    %v1339 = vpop.permute.xlu0 %1338
    %1342 = vset.pattern.permute.xlu0 0
    %1343 = vperm.xlu0 %1342, %v1333
    %v1344 = vpop.permute.xlu0 %1343
    %1347 = vset.pattern.permute.xlu0 0
    %1348 = vperm.xlu0 %1347, %v1334
    %v1349 = vpop.permute.xlu0 %1348
    %1352 = vset.pattern.permute.xlu0 0
    %1353 = vperm.xlu0 %1352, %v1335
    %v1354 = vpop.permute.xlu0 %1353
    %v1356 = vmul.f32 %v75, %v1339
    %v1357 = vmul.f32 %v76, %v1339
    %v1358 = vmul.f32 %v77, %v1344
    %v1359 = vmul.f32 %v78, %v1344
    %v1360 = vmul.f32 %v79, %v1349
    %v1361 = vmul.f32 %v80, %v1349
    %v1362 = vmul.f32 %v81, %v1354
    %v1363 = vmul.f32 %v82, %v1354
    %v1364 = vmul.f32 %v83, %v1339
    %v1365 = vmul.f32 %v84, %v1339
    %v1366 = vmul.f32 %v85, %v1344
    %v1367 = vmul.f32 %v86, %v1344
    %v1368 = vmul.f32 %v87, %v1349
    %v1369 = vmul.f32 %v88, %v1349
    %v1370 = vmul.f32 %v89, %v1354
    %v1371 = vmul.f32 %v90, %v1354
    %v1372 = vadd.f32 %v1356, %v1358
    %v1373 = vadd.f32 %v1372, %v1360
    %v1374 = vadd.f32 %v1373, %v1362
    %v1375 = vrot.slane %v1374, 4
    %v1376 = vadd.f32 %v1374, %v1375
    %v1377 = vrot.slane %v1376, 2
    %v1378 = vadd.f32 %v1376, %v1377
    %v1379 = vrot.slane %v1378, 1
    %v1380 = vadd.f32 %v1378, %v1379
    %v1381 = vadd.f32 %v1357, %v1359
    %v1382 = vadd.f32 %v1381, %v1361
    %v1383 = vadd.f32 %v1382, %v1363
    %v1384 = vrot.slane %v1383, 4
    %v1385 = vadd.f32 %v1383, %v1384
    %v1386 = vrot.slane %v1385, 2
    %v1387 = vadd.f32 %v1385, %v1386
    %v1388 = vrot.slane %v1387, 1
    %v1389 = vadd.f32 %v1387, %v1388
    %v1390 = vadd.f32 %v1364, %v1366
    %v1391 = vadd.f32 %v1390, %v1368
    %v1392 = vadd.f32 %v1391, %v1370
    %v1393 = vrot.slane %v1392, 4
    %v1394 = vadd.f32 %v1392, %v1393
    %v1395 = vrot.slane %v1394, 2
    %v1396 = vadd.f32 %v1394, %v1395
    %v1397 = vrot.slane %v1396, 1
    %v1398 = vadd.f32 %v1396, %v1397
    %v1399 = vadd.f32 %v1365, %v1367
    %v1400 = vadd.f32 %v1399, %v1369
    %v1401 = vadd.f32 %v1400, %v1371
    %v1402 = vrot.slane %v1401, 4
    %v1403 = vadd.f32 %v1401, %v1402
    %v1404 = vrot.slane %v1403, 2
    %v1405 = vadd.f32 %v1403, %v1404
    %v1406 = vrot.slane %v1405, 1
    %v1407 = vadd.f32 %v1405, %v1406
    %s1408 = sld [smem:[#allocation2]]
    %v1409 = vstv %s1408
    %v1410 = vadd.f32 %v1380, %v1409
    %v1411 = vadd.f32 %v1389, %v1409
    %v1412 = vadd.f32 %v1398, %v1409
    %v1413 = vadd.f32 %v1407, %v1409
    %v1414 = vxor.u32 %v1410, 2147483648
    %v1415 = vxor.u32 %v1411, 2147483648
    %v1416 = vxor.u32 %v1412, 2147483648
    %v1417 = vxor.u32 %v1413, 2147483648
    %v1418 = vmul.f32 %v1414, 1.442695
    %v1419 = vpow.pop %v1418
    %v1420 = vmul.f32 %v1415, 1.442695
    %v1421 = vpow.pop %v1420
    %v1422 = vmul.f32 %v1416, 1.442695
    %v1423 = vpow.pop %v1422
    %v1424 = vmul.f32 %v1417, 1.442695
    %v1425 = vpow.pop %v1424
    %v1426 = vadd.f32 %v1419, 1.0
    %v1427 = vadd.f32 %v1421, 1.0
    %v1428 = vadd.f32 %v1423, 1.0
    %v1429 = vadd.f32 %v1425, 1.0
    %v1430 = vrcp.pop %v1426
    %v1431 = vmul.f32 1.0, %v1430
    %v1432 = vrcp.pop %v1427
    %v1433 = vmul.f32 1.0, %v1432
    %v1434 = vrcp.pop %v1428
    %v1435 = vmul.f32 1.0, %v1434
    %v1436 = vrcp.pop %v1429
    %v1437 = vmul.f32 1.0, %v1436
    %v1438 = vadd.f32 %v1317, %v1431
    %v1439 = vadd.f32 %v1317, %v1433
    %v1440 = vadd.f32 %v1319, %v1431
    %v1441 = vadd.f32 %v1319, %v1433
    %v1442 = vadd.f32 %v1321, %v1431
    %v1443 = vadd.f32 %v1321, %v1433
    %v1444 = vadd.f32 %v1323, %v1431
    %v1445 = vadd.f32 %v1323, %v1433
    %v1446 = vadd.f32 %v1325, %v1435
    %v1447 = vadd.f32 %v1325, %v1437
    %v1448 = vadd.f32 %v1327, %v1435
    %v1449 = vadd.f32 %v1327, %v1437
    %v1450 = vadd.f32 %v1329, %v1435
    %v1451 = vadd.f32 %v1329, %v1437
    %v1452 = vadd.f32 %v1331, %v1435
    %v1453 = vadd.f32 %v1331, %v1437
    %v1454 = vmul.f32 %v75, %v1438
    %v1455 = vmul.f32 %v76, %v1439
    %v1456 = vmul.f32 %v77, %v1440
    %v1457 = vmul.f32 %v78, %v1441
    %v1458 = vmul.f32 %v79, %v1442
    %v1459 = vmul.f32 %v80, %v1443
    %v1460 = vmul.f32 %v81, %v1444
    %v1461 = vmul.f32 %v82, %v1445
    %v1462 = vmul.f32 %v83, %v1446
    %v1463 = vmul.f32 %v84, %v1447
    %v1464 = vmul.f32 %v85, %v1448
    %v1465 = vmul.f32 %v86, %v1449
    %v1466 = vmul.f32 %v87, %v1450
    %v1467 = vmul.f32 %v88, %v1451
    %v1468 = vmul.f32 %v89, %v1452
    %v1469 = vmul.f32 %v90, %v1453
    %1470 = vst [vmem:[#allocation11] sm:$0xff] %v1454
    %1471 = vst [vmem:[#allocation11 + $0x8] sm:$0xff] %v1455
    %1472 = vst [vmem:[#allocation11 + $0x10] sm:$0xff] %v1456
    %1473 = vst [vmem:[#allocation11 + $0x18] sm:$0xff] %v1457
    %1474 = vst [vmem:[#allocation11 + $0x20] sm:$0xff] %v1458
    %1475 = vst [vmem:[#allocation11 + $0x28] sm:$0xff] %v1459
    %1476 = vst [vmem:[#allocation11 + $0x30] sm:$0xff] %v1460
    %1477 = vst [vmem:[#allocation11 + $0x38] sm:$0xff] %v1461
    %1478 = vst [vmem:[#allocation11 + $0x40] sm:$0xff] %v1462
    %1479 = vst [vmem:[#allocation11 + $0x48] sm:$0xff] %v1463
    %1480 = vst [vmem:[#allocation11 + $0x50] sm:$0xff] %v1464
    %1481 = vst [vmem:[#allocation11 + $0x58] sm:$0xff] %v1465
    %1482 = vst [vmem:[#allocation11 + $0x60] sm:$0xff] %v1466
    %1483 = vst [vmem:[#allocation11 + $0x68] sm:$0xff] %v1467
    %1484 = vst [vmem:[#allocation11 + $0x70] sm:$0xff] %v1468
    %1485 = vst [vmem:[#allocation11 + $0x78] sm:$0xff] %v1469
    // Predicated region
    $region38: #{tpu_custom_call.1} parent=1 // pred_check
      _
    $region39: #{tpu_custom_call.1} parent=1 // pred_check_branch
      %1487 = sbr.rel (0) target = $region41
    $region40: #{tpu_custom_call.1} parent=1 // pred_region
      %s1489 = ssub.s32 2048, 2048
      %1490 = vsyncadd [#allocation5], %s1489
      %s1491 = sshll.u32 [#allocation11], 4
      %s1492 = int_to_ptr.vmem [resolvable:$true] %s1491
      %1497 = dma.vmem_to_hbm [thread:$0]  %s1492, 2048, %s5, [#allocation5], 256, 256, 16
    $region41: #{tpu_custom_call.1} parent=1 // pred_fallthru
      _
    // Predicated region
    $region42: #{tpu_custom_call.1} parent=1 // pred_check
      _
    $region43: #{tpu_custom_call.1} parent=1 // pred_check_branch
      %1499 = sbr.rel (0) target = $region45
    $region44: #{tpu_custom_call.1} parent=1 // pred_region
      %1500 = dma.done [#allocation5], 2048
    $region45: #{tpu_custom_call.1} parent=1 // pred_fallthru
      _
    %1501 = vsyncpa [#allocation4], 1
    %1502 = vsyncpa [#allocation7], 1
    %1503 = vsyncpa [#allocation10], 1
    %1504 = vsyncpa [#allocation5], 1

</llo_original>
